<compile_context>
chip_gen: v6e
topology: v6e:2x2x1
jax: 0.10.0
libtpu: 0.0.40
codegen_flags: <defaults>
</compile_context>

<pallas_src>
import functools

import jax
import jax.numpy as jnp
from jax import lax
from jax.experimental import pallas as pl
from jax.experimental.pallas import tpu as pltpu

DECAY = 0.9
THRESHOLD = 1.0

_LANE = 128     # lane width: pad feature dims to this
_SUBLANE = 8    # sublane width: pad batch dim to this


def _snn_kernel(x_ref, w_ref, b_ref, o_ref, *, time_steps):
    # Synaptic current: identical every time step (no encoder) -> compute once.
    cur = jnp.dot(x_ref[...], w_ref[...], preferred_element_type=jnp.float32)
    cur = cur + b_ref[...]

    v0 = jnp.zeros_like(cur)     # reset_states(): membrane potential = 0
    acc0 = jnp.zeros_like(cur)   # spike-count accumulator

    def lif_step(_, carry):
        v, acc = carry
        v = v * DECAY + cur
        fired = v >= THRESHOLD
        acc = acc + jnp.where(fired, 1.0, 0.0)   # accumulate spikes
        v = jnp.where(fired, 0.0, v)             # hard reset on spike
        return v, acc

    # State is one vreg-sized tile; keep it in registers, fully unrolled.
    _, acc = lax.fori_loop(0, time_steps, lif_step, (v0, acc0), unroll=True)

    # Default decoder: mean over time (constant multiply, no runtime divide).
    o_ref[...] = (acc * (1.0 / time_steps)).astype(o_ref.dtype)


def _pad2d(a, rows, cols):
    r, c = a.shape
    return jnp.pad(a, ((0, rows - r), (0, cols - c)))


def spiking_module_forward(x, w_t, b, time_steps=10):
    """x: (B, F_in) f32, w_t: (F_in, F_out) f32 (pre-transposed), b: (1, F_out)."""
    B, F_in = x.shape
    F_out = w_t.shape[1]

    # Lane/sublane-dense padded shapes (padding is zeros -> padded outputs are
    # zero-current, never spike, and are sliced off below).
    B_p = max(_SUBLANE, ((B + _SUBLANE - 1) // _SUBLANE) * _SUBLANE)
    Fi_p = max(_LANE, ((F_in + _LANE - 1) // _LANE) * _LANE)
    Fo_p = max(_LANE, ((F_out + _LANE - 1) // _LANE) * _LANE)

    x_p = _pad2d(x.astype(jnp.float32), B_p, Fi_p)
    w_p = _pad2d(w_t.astype(jnp.float32), Fi_p, Fo_p)
    b_p = _pad2d(b.astype(jnp.float32), 1, Fo_p)

    out_p = pl.pallas_call(
        functools.partial(_snn_kernel, time_steps=time_steps),
        out_shape=jax.ShapeDtypeStruct((B_p, Fo_p), jnp.float32),
        grid_spec=pltpu.PrefetchScalarGridSpec(
            num_scalar_prefetch=0,
            grid=(1,),  # time loop is inside the kernel (state lives in vregs)
            in_specs=[
                pl.BlockSpec((B_p, Fi_p), lambda i: (0, 0)),
                pl.BlockSpec((Fi_p, Fo_p), lambda i: (0, 0)),
                pl.BlockSpec((1, Fo_p), lambda i: (0, 0)),
            ],
            out_specs=pl.BlockSpec((B_p, Fo_p), lambda i: (0, 0)),
        ),
        compiler_params=pltpu.CompilerParams(
            dimension_semantics=("arbitrary",),
        ),
    )(x_p, w_p, b_p)

    return out_p[:B, :F_out]


def _reference_forward(x, w_t, b, time_steps=10):
    """Pure-JAX reference of the same SpikingModule forward."""
    B, _ = x.shape
    F_out = w_t.shape[1]
    v = jnp.zeros((B, F_out), jnp.float32)
    acc = jnp.zeros((B, F_out), jnp.float32)
    cur = x @ w_t + b
    for _ in range(time_steps):
        v = v * DECAY + cur
        s = (v >= THRESHOLD).astype(jnp.float32)
        v = v * (1.0 - s)
        acc = acc + s
    return acc / time_steps


if __name__ == "__main__":
    # Small shapes consistent with a spiking-linear layer: batch=8, in=32, out=32
    B, F_IN, F_OUT = 8, 32, 32
    TIME_STEPS = 10

    key = jax.random.PRNGKey(0)
    kx, kw, kb = jax.random.split(key, 3)
    x = jax.random.normal(kx, (B, F_IN), dtype=jnp.float32)
    # nn.Linear weight is (out, in); store transposed as (in, out) for the kernel
    w = jax.random.normal(kw, (F_OUT, F_IN), dtype=jnp.float32) * (1.0 / jnp.sqrt(F_IN))
    w_t = w.T
    b = jax.random.normal(kb, (1, F_OUT), dtype=jnp.float32) * 0.1

    out = spiking_module_forward(x, w_t, b, time_steps=TIME_STEPS)
    out = jax.block_until_ready(out)

    ref = _reference_forward(x, w_t, b, time_steps=TIME_STEPS)
    assert out.shape == (B, F_OUT)
    assert jnp.max(jnp.abs(out - ref)) < 1e-5

    print("KERNEL_OK")
</pallas_src>

<mosaic_0001>
module attributes {stable_mosaic.version = 11 : i64} {
  func.func @_snn_kernel(%arg0: i32, %arg1: memref<8x128xf32, #tpu.memory_space<vmem>>, %arg2: memref<128x128xf32, #tpu.memory_space<vmem>>, %arg3: memref<1x128xf32, #tpu.memory_space<vmem>>, %arg4: memref<8x128xf32, #tpu.memory_space<vmem>>) attributes {dimension_semantics = [#tpu.dimension_semantics<arbitrary>], iteration_bounds = array<i64: 1>, scalar_prefetch = 0 : i64, scratch_operands = 0 : i64, tpu.core_type = #tpu.core_type<tc>, window_params = [{pipeline_mode = #tpu.pipeline_mode<synchronous>, transform_indices = @transform_0, window_bounds = array<i64: 8, 128>}, {pipeline_mode = #tpu.pipeline_mode<synchronous>, transform_indices = @transform_1, window_bounds = array<i64: 128, 128>}, {pipeline_mode = #tpu.pipeline_mode<synchronous>, transform_indices = @transform_2, window_bounds = array<i64: 1, 128>}, {pipeline_mode = #tpu.pipeline_mode<synchronous>, transform_indices = @transform_3, window_bounds = array<i64: 8, 128>}]} {
    %c0 = arith.constant 0 : index
    %c0_0 = arith.constant 0 : index
    %0 = vector.load %arg1[%c0, %c0_0] : memref<8x128xf32, #tpu.memory_space<vmem>>, vector<8x128xf32>
    %c0_1 = arith.constant 0 : index
    %c0_2 = arith.constant 0 : index
    %1 = vector.load %arg2[%c0_1, %c0_2] : memref<128x128xf32, #tpu.memory_space<vmem>>, vector<128x128xf32>
    %cst = arith.constant dense<0.000000e+00> : vector<8x128xf32>
    %2 = tpu.matmul %0, %1, %cst {dimension_numbers = #tpu.dot_dimension_numbers<[1], [0], [0], [1], [0, 0, 1, 1], [], []>} : vector<8x128xf32>, vector<128x128xf32>, vector<8x128xf32> -> vector<8x128xf32>
    %c0_3 = arith.constant 0 : index
    %c0_4 = arith.constant 0 : index
    %3 = vector.load %arg3[%c0_3, %c0_4] : memref<1x128xf32, #tpu.memory_space<vmem>>, vector<1x128xf32>
    %4 = vector.broadcast %3 : vector<1x128xf32> to vector<8x128xf32>
    %5 = arith.addf %2, %4 : vector<8x128xf32>
    %cst_5 = arith.constant 0.000000e+00 : f32
    %6 = vector.broadcast %cst_5 : f32 to vector<8x128xf32>
    %cst_6 = arith.constant 0.000000e+00 : f32
    %7 = vector.broadcast %cst_6 : f32 to vector<8x128xf32>
    %c0_i32 = arith.constant 0 : i32
    %cst_7 = arith.constant 0.899999976 : f32
    %8 = vector.broadcast %cst_7 : f32 to vector<8x128xf32>
    %9 = arith.mulf %6, %8 : vector<8x128xf32>
    %10 = arith.addf %9, %5 : vector<8x128xf32>
    %cst_8 = arith.constant 1.000000e+00 : f32
    %11 = vector.broadcast %cst_8 : f32 to vector<8x128xf32>
    %12 = arith.cmpf oge, %10, %11 : vector<8x128xf32>
    %cst_9 = arith.constant 1.000000e+00 : f32
    %cst_10 = arith.constant 0.000000e+00 : f32
    %13 = vector.broadcast %cst_9 : f32 to vector<8x128xf32>
    %14 = vector.broadcast %cst_10 : f32 to vector<8x128xf32>
    %15 = arith.select %12, %13, %14 : vector<8x128xi1>, vector<8x128xf32>
    %16 = arith.addf %7, %15 : vector<8x128xf32>
    %cst_11 = arith.constant 0.000000e+00 : f32
    %17 = vector.broadcast %cst_11 : f32 to vector<8x128xf32>
    %18 = arith.select %12, %17, %10 : vector<8x128xi1>, vector<8x128xf32>
    %c1_i32 = arith.constant 1 : i32
    %cst_12 = arith.constant 0.899999976 : f32
    %19 = vector.broadcast %cst_12 : f32 to vector<8x128xf32>
    %20 = arith.mulf %18, %19 : vector<8x128xf32>
    %21 = arith.addf %20, %5 : vector<8x128xf32>
    %cst_13 = arith.constant 1.000000e+00 : f32
    %22 = vector.broadcast %cst_13 : f32 to vector<8x128xf32>
    %23 = arith.cmpf oge, %21, %22 : vector<8x128xf32>
    %cst_14 = arith.constant 1.000000e+00 : f32
    %cst_15 = arith.constant 0.000000e+00 : f32
    %24 = vector.broadcast %cst_14 : f32 to vector<8x128xf32>
    %25 = vector.broadcast %cst_15 : f32 to vector<8x128xf32>
    %26 = arith.select %23, %24, %25 : vector<8x128xi1>, vector<8x128xf32>
    %27 = arith.addf %16, %26 : vector<8x128xf32>
    %cst_16 = arith.constant 0.000000e+00 : f32
    %28 = vector.broadcast %cst_16 : f32 to vector<8x128xf32>
    %29 = arith.select %23, %28, %21 : vector<8x128xi1>, vector<8x128xf32>
    %c2_i32 = arith.constant 2 : i32
    %cst_17 = arith.constant 0.899999976 : f32
    %30 = vector.broadcast %cst_17 : f32 to vector<8x128xf32>
    %31 = arith.mulf %29, %30 : vector<8x128xf32>
    %32 = arith.addf %31, %5 : vector<8x128xf32>
    %cst_18 = arith.constant 1.000000e+00 : f32
    %33 = vector.broadcast %cst_18 : f32 to vector<8x128xf32>
    %34 = arith.cmpf oge, %32, %33 : vector<8x128xf32>
    %cst_19 = arith.constant 1.000000e+00 : f32
    %cst_20 = arith.constant 0.000000e+00 : f32
    %35 = vector.broadcast %cst_19 : f32 to vector<8x128xf32>
    %36 = vector.broadcast %cst_20 : f32 to vector<8x128xf32>
    %37 = arith.select %34, %35, %36 : vector<8x128xi1>, vector<8x128xf32>
    %38 = arith.addf %27, %37 : vector<8x128xf32>
    %cst_21 = arith.constant 0.000000e+00 : f32
    %39 = vector.broadcast %cst_21 : f32 to vector<8x128xf32>
    %40 = arith.select %34, %39, %32 : vector<8x128xi1>, vector<8x128xf32>
    %c3_i32 = arith.constant 3 : i32
    %cst_22 = arith.constant 0.899999976 : f32
    %41 = vector.broadcast %cst_22 : f32 to vector<8x128xf32>
    %42 = arith.mulf %40, %41 : vector<8x128xf32>
    %43 = arith.addf %42, %5 : vector<8x128xf32>
    %cst_23 = arith.constant 1.000000e+00 : f32
    %44 = vector.broadcast %cst_23 : f32 to vector<8x128xf32>
    %45 = arith.cmpf oge, %43, %44 : vector<8x128xf32>
    %cst_24 = arith.constant 1.000000e+00 : f32
    %cst_25 = arith.constant 0.000000e+00 : f32
    %46 = vector.broadcast %cst_24 : f32 to vector<8x128xf32>
    %47 = vector.broadcast %cst_25 : f32 to vector<8x128xf32>
    %48 = arith.select %45, %46, %47 : vector<8x128xi1>, vector<8x128xf32>
    %49 = arith.addf %38, %48 : vector<8x128xf32>
    %cst_26 = arith.constant 0.000000e+00 : f32
    %50 = vector.broadcast %cst_26 : f32 to vector<8x128xf32>
    %51 = arith.select %45, %50, %43 : vector<8x128xi1>, vector<8x128xf32>
    %c4_i32 = arith.constant 4 : i32
    %cst_27 = arith.constant 0.899999976 : f32
    %52 = vector.broadcast %cst_27 : f32 to vector<8x128xf32>
    %53 = arith.mulf %51, %52 : vector<8x128xf32>
    %54 = arith.addf %53, %5 : vector<8x128xf32>
    %cst_28 = arith.constant 1.000000e+00 : f32
    %55 = vector.broadcast %cst_28 : f32 to vector<8x128xf32>
    %56 = arith.cmpf oge, %54, %55 : vector<8x128xf32>
    %cst_29 = arith.constant 1.000000e+00 : f32
    %cst_30 = arith.constant 0.000000e+00 : f32
    %57 = vector.broadcast %cst_29 : f32 to vector<8x128xf32>
    %58 = vector.broadcast %cst_30 : f32 to vector<8x128xf32>
    %59 = arith.select %56, %57, %58 : vector<8x128xi1>, vector<8x128xf32>
    %60 = arith.addf %49, %59 : vector<8x128xf32>
    %cst_31 = arith.constant 0.000000e+00 : f32
    %61 = vector.broadcast %cst_31 : f32 to vector<8x128xf32>
    %62 = arith.select %56, %61, %54 : vector<8x128xi1>, vector<8x128xf32>
    %c5_i32 = arith.constant 5 : i32
    %cst_32 = arith.constant 0.899999976 : f32
    %63 = vector.broadcast %cst_32 : f32 to vector<8x128xf32>
    %64 = arith.mulf %62, %63 : vector<8x128xf32>
    %65 = arith.addf %64, %5 : vector<8x128xf32>
    %cst_33 = arith.constant 1.000000e+00 : f32
    %66 = vector.broadcast %cst_33 : f32 to vector<8x128xf32>
    %67 = arith.cmpf oge, %65, %66 : vector<8x128xf32>
    %cst_34 = arith.constant 1.000000e+00 : f32
    %cst_35 = arith.constant 0.000000e+00 : f32
    %68 = vector.broadcast %cst_34 : f32 to vector<8x128xf32>
    %69 = vector.broadcast %cst_35 : f32 to vector<8x128xf32>
    %70 = arith.select %67, %68, %69 : vector<8x128xi1>, vector<8x128xf32>
    %71 = arith.addf %60, %70 : vector<8x128xf32>
    %cst_36 = arith.constant 0.000000e+00 : f32
    %72 = vector.broadcast %cst_36 : f32 to vector<8x128xf32>
    %73 = arith.select %67, %72, %65 : vector<8x128xi1>, vector<8x128xf32>
    %c6_i32 = arith.constant 6 : i32
    %cst_37 = arith.constant 0.899999976 : f32
    %74 = vector.broadcast %cst_37 : f32 to vector<8x128xf32>
    %75 = arith.mulf %73, %74 : vector<8x128xf32>
    %76 = arith.addf %75, %5 : vector<8x128xf32>
    %cst_38 = arith.constant 1.000000e+00 : f32
    %77 = vector.broadcast %cst_38 : f32 to vector<8x128xf32>
    %78 = arith.cmpf oge, %76, %77 : vector<8x128xf32>
    %cst_39 = arith.constant 1.000000e+00 : f32
    %cst_40 = arith.constant 0.000000e+00 : f32
    %79 = vector.broadcast %cst_39 : f32 to vector<8x128xf32>
    %80 = vector.broadcast %cst_40 : f32 to vector<8x128xf32>
    %81 = arith.select %78, %79, %80 : vector<8x128xi1>, vector<8x128xf32>
    %82 = arith.addf %71, %81 : vector<8x128xf32>
    %cst_41 = arith.constant 0.000000e+00 : f32
    %83 = vector.broadcast %cst_41 : f32 to vector<8x128xf32>
    %84 = arith.select %78, %83, %76 : vector<8x128xi1>, vector<8x128xf32>
    %c7_i32 = arith.constant 7 : i32
    %cst_42 = arith.constant 0.899999976 : f32
    %85 = vector.broadcast %cst_42 : f32 to vector<8x128xf32>
    %86 = arith.mulf %84, %85 : vector<8x128xf32>
    %87 = arith.addf %86, %5 : vector<8x128xf32>
    %cst_43 = arith.constant 1.000000e+00 : f32
    %88 = vector.broadcast %cst_43 : f32 to vector<8x128xf32>
    %89 = arith.cmpf oge, %87, %88 : vector<8x128xf32>
    %cst_44 = arith.constant 1.000000e+00 : f32
    %cst_45 = arith.constant 0.000000e+00 : f32
    %90 = vector.broadcast %cst_44 : f32 to vector<8x128xf32>
    %91 = vector.broadcast %cst_45 : f32 to vector<8x128xf32>
    %92 = arith.select %89, %90, %91 : vector<8x128xi1>, vector<8x128xf32>
    %93 = arith.addf %82, %92 : vector<8x128xf32>
    %cst_46 = arith.constant 0.000000e+00 : f32
    %94 = vector.broadcast %cst_46 : f32 to vector<8x128xf32>
    %95 = arith.select %89, %94, %87 : vector<8x128xi1>, vector<8x128xf32>
    %c8_i32 = arith.constant 8 : i32
    %cst_47 = arith.constant 0.899999976 : f32
    %96 = vector.broadcast %cst_47 : f32 to vector<8x128xf32>
    %97 = arith.mulf %95, %96 : vector<8x128xf32>
    %98 = arith.addf %97, %5 : vector<8x128xf32>
    %cst_48 = arith.constant 1.000000e+00 : f32
    %99 = vector.broadcast %cst_48 : f32 to vector<8x128xf32>
    %100 = arith.cmpf oge, %98, %99 : vector<8x128xf32>
    %cst_49 = arith.constant 1.000000e+00 : f32
    %cst_50 = arith.constant 0.000000e+00 : f32
    %101 = vector.broadcast %cst_49 : f32 to vector<8x128xf32>
    %102 = vector.broadcast %cst_50 : f32 to vector<8x128xf32>
    %103 = arith.select %100, %101, %102 : vector<8x128xi1>, vector<8x128xf32>
    %104 = arith.addf %93, %103 : vector<8x128xf32>
    %cst_51 = arith.constant 0.000000e+00 : f32
    %105 = vector.broadcast %cst_51 : f32 to vector<8x128xf32>
    %106 = arith.select %100, %105, %98 : vector<8x128xi1>, vector<8x128xf32>
    %c9_i32 = arith.constant 9 : i32
    %cst_52 = arith.constant 0.899999976 : f32
    %107 = vector.broadcast %cst_52 : f32 to vector<8x128xf32>
    %108 = arith.mulf %106, %107 : vector<8x128xf32>
    %109 = arith.addf %108, %5 : vector<8x128xf32>
    %cst_53 = arith.constant 1.000000e+00 : f32
    %110 = vector.broadcast %cst_53 : f32 to vector<8x128xf32>
    %111 = arith.cmpf oge, %109, %110 : vector<8x128xf32>
    %cst_54 = arith.constant 1.000000e+00 : f32
    %cst_55 = arith.constant 0.000000e+00 : f32
    %112 = vector.broadcast %cst_54 : f32 to vector<8x128xf32>
    %113 = vector.broadcast %cst_55 : f32 to vector<8x128xf32>
    %114 = arith.select %111, %112, %113 : vector<8x128xi1>, vector<8x128xf32>
    %115 = arith.addf %104, %114 : vector<8x128xf32>
    %cst_56 = arith.constant 0.000000e+00 : f32
    %116 = vector.broadcast %cst_56 : f32 to vector<8x128xf32>
    %117 = arith.select %111, %116, %109 : vector<8x128xi1>, vector<8x128xf32>
    %cst_57 = arith.constant 1.000000e-01 : f32
    %118 = vector.broadcast %cst_57 : f32 to vector<8x128xf32>
    %119 = arith.mulf %115, %118 : vector<8x128xf32>
    %c0_58 = arith.constant 0 : index
    %c0_59 = arith.constant 0 : index
    %120 = vector.load %arg4[%c0_58, %c0_59] : memref<8x128xf32, #tpu.memory_space<vmem>>, vector<8x128xf32>
    tpu.vector_store %arg4[%c0_58, %c0_59], %119 {strides = array<i32>} : memref<8x128xf32, #tpu.memory_space<vmem>>, vector<8x128xf32>,
    return
  }
  func.func @transform_0(%arg0: i32) -> (i32, i32) {
    %c0_i32 = arith.constant 0 : i32
    %c0_i32_0 = arith.constant 0 : i32
    %c0_i32_1 = arith.constant 0 : i32
    return %c0_i32, %c0_i32_0 : i32, i32
  }
  func.func @transform_1(%arg0: i32) -> (i32, i32) {
    %c0_i32 = arith.constant 0 : i32
    %c0_i32_0 = arith.constant 0 : i32
    %c0_i32_1 = arith.constant 0 : i32
    return %c0_i32, %c0_i32_0 : i32, i32
  }
  func.func @transform_2(%arg0: i32) -> (i32, i32) {
    %c0_i32 = arith.constant 0 : i32
    %c0_i32_0 = arith.constant 0 : i32
    %c0_i32_1 = arith.constant 0 : i32
    return %c0_i32, %c0_i32_0 : i32, i32
  }
  func.func @transform_3(%arg0: i32) -> (i32, i32) {
    %c0_i32 = arith.constant 0 : i32
    %c0_i32_0 = arith.constant 0 : i32
    %c0_i32_1 = arith.constant 0 : i32
    return %c0_i32, %c0_i32_0 : i32, i32
  }
}

</mosaic_0001>

<llo_original>
// kernel: tpu_custom_call.1
$region0: #{tpu_custom_call.1}
  #allocation0 [shape = 'u32[]', space=smem, size = 0x4, offset = 0x4, fixed_abs, tag = 'smem constant byte address 0x4 - core index']
  #allocation1 [shape = 'u32[144,128]{1,0:T(1,128)}', space=vmem, size = 0x12000, scoped, tag = 'internal scratch']
  %s0 = inlined_call_operand.hbm [shape: f32[8,128], index: 0, kind: input, shape index: {}]
  %s1 = inlined_call_operand.hbm [shape: f32[128,128], index: 1, kind: input, shape index: {}]
  %s2 = inlined_call_operand.vmem [shape: f32[1,128], index: 2, kind: input, shape index: {}]
  %s3 = inlined_call_operand.hbm [shape: f32[8,128], index: 3, kind: output, shape index: {}]
  %s4 = sld [smem:[#allocation0]]
  $region30: #{tpu_custom_call.1} parent=0
    _
  %s6 = ssub.s32 1, %s4
  %s7 = scalar_select 0, %s6, %s4
  $region1: #{tpu_custom_call.1} parent=0
    #allocation2 [shape = 'u8[4096]{0}', space=vmem, size = 0x1000, scoped, tag = 'input window, operand 0, single buffered']
    #allocation3 [shape = 's32[1]{0}', space=sflag, size = 0x4, scoped, tag = 'scoped memory for tpu_custom_call.1']
    #allocation4 [shape = 's32[1]{0}', space=sflag, size = 0x4, scoped, tag = 'scoped memory for tpu_custom_call.1']
    #allocation5 [shape = 'u8[65536]{0}', space=vmem, size = 0x10000, scoped, tag = 'input window, operand 1, single buffered']
    #allocation6 [shape = 's32[1]{0}', space=sflag, size = 0x4, scoped, tag = 'scoped memory for tpu_custom_call.1']
    #allocation7 [shape = 'u8[4096]{0}', space=vmem, size = 0x1000, scoped, tag = 'output window, operand 0, single buffered']
    %8 = vsyncpa [#allocation3], 0
    %9 = vsyncpa [#allocation6], 0
    %10 = vsyncpa [#allocation4], 0
    // Predicated region
    $region2: #{tpu_custom_call.1} parent=1 // pred_check
      _
    $region3: #{tpu_custom_call.1} parent=1 // pred_check_branch
      %12 = sbr.rel (0) target = $region5
    $region4: #{tpu_custom_call.1} parent=1 // pred_region
      %s14 = ssub.s32 128, 128
      %15 = vsyncadd [#allocation3], %s14
      %s17 = sshll.u32 [#allocation2], 4
      %s18 = int_to_ptr.vmem [resolvable:$true] %s17
      %20 = dma.hbm_to_vmem [thread:$0]  %s0, 128, %s18, [#allocation3]
    $region5: #{tpu_custom_call.1} parent=1 // pred_fallthru
      _
    // Predicated region
    $region6: #{tpu_custom_call.1} parent=1 // pred_check
      _
    $region7: #{tpu_custom_call.1} parent=1 // pred_check_branch
      %22 = sbr.rel (0) target = $region9
    $region8: #{tpu_custom_call.1} parent=1 // pred_region
      %s24 = ssub.s32 2048, 2048
      %25 = vsyncadd [#allocation6], %s24
      %s26 = sshll.u32 [#allocation5], 4
      %s27 = int_to_ptr.vmem [resolvable:$true] %s26
      %32 = dma.hbm_to_vmem [thread:$0]  %s1, 2048, %s27, [#allocation6], 128, 128, 8
    $region9: #{tpu_custom_call.1} parent=1 // pred_fallthru
      _
    // Predicated region
    $region10: #{tpu_custom_call.1} parent=1 // pred_check
      _
    $region11: #{tpu_custom_call.1} parent=1 // pred_check_branch
      %34 = sbr.rel (0) target = $region13
    $region12: #{tpu_custom_call.1} parent=1 // pred_region
      _
    $region13: #{tpu_custom_call.1} parent=1 // pred_fallthru
      _
    // Predicated region
    $region14: #{tpu_custom_call.1} parent=1 // pred_check
      _
    $region15: #{tpu_custom_call.1} parent=1 // pred_check_branch
      %36 = sbr.rel (0) target = $region17
    $region16: #{tpu_custom_call.1} parent=1 // pred_region
      %37 = dma.done [#allocation3], 128
    $region17: #{tpu_custom_call.1} parent=1 // pred_fallthru
      _
    // Predicated region
    $region18: #{tpu_custom_call.1} parent=1 // pred_check
      _
    $region19: #{tpu_custom_call.1} parent=1 // pred_check_branch
      %39 = sbr.rel (0) target = $region21
    $region20: #{tpu_custom_call.1} parent=1 // pred_region
      %40 = dma.done [#allocation6], 2048
    $region21: #{tpu_custom_call.1} parent=1 // pred_fallthru
      _
    %v41 = vld [vmem:[#allocation2] sm:$0xff]
    %v42 = vld [vmem:[#allocation5] sm:$0xff]
    %v43 = vld [vmem:[#allocation5 + $0x8] sm:$0xff]
    %v44 = vld [vmem:[#allocation5 + $0x10] sm:$0xff]
    %v45 = vld [vmem:[#allocation5 + $0x18] sm:$0xff]
    %v46 = vld [vmem:[#allocation5 + $0x20] sm:$0xff]
    %v47 = vld [vmem:[#allocation5 + $0x28] sm:$0xff]
    %v48 = vld [vmem:[#allocation5 + $0x30] sm:$0xff]
    %v49 = vld [vmem:[#allocation5 + $0x38] sm:$0xff]
    %v50 = vld [vmem:[#allocation5 + $0x40] sm:$0xff]
    %v51 = vld [vmem:[#allocation5 + $0x48] sm:$0xff]
    %v52 = vld [vmem:[#allocation5 + $0x50] sm:$0xff]
    %v53 = vld [vmem:[#allocation5 + $0x58] sm:$0xff]
    %v54 = vld [vmem:[#allocation5 + $0x60] sm:$0xff]
    %v55 = vld [vmem:[#allocation5 + $0x68] sm:$0xff]
    %v56 = vld [vmem:[#allocation5 + $0x70] sm:$0xff]
    %v57 = vld [vmem:[#allocation5 + $0x78] sm:$0xff]
    %v58 = vld [vmem:[%s2] sm:$0x1]
    %v60 = vlaneseq
    %v61 = vshrl.u32 %v60, 7
    %v62 = vsub.s32 0, %v61
    %v63 = vrot.slane %v58, %v62
    %65 = vmatprep.subr.mxu0 0.0
    %66 = vmatpush1.msra.mxu0 %v57
    %67 = vmatprep.subr.mxu0 0.0
    %68 = vmatpush1.msra.mxu0 %v56
    %69 = vmatprep.subr.mxu0 0.0
    %70 = vmatpush1.msra.mxu0 %v55
    %71 = vmatprep.subr.mxu0 0.0
    %72 = vmatpush1.msra.mxu0 %v54
    %73 = vmatprep.subr.mxu0 0.0
    %74 = vmatpush1.msra.mxu0 %v53
    %75 = vmatprep.subr.mxu0 0.0
    %76 = vmatpush1.msra.mxu0 %v52
    %77 = vmatprep.subr.mxu0 0.0
    %78 = vmatpush1.msra.mxu0 %v51
    %79 = vmatprep.subr.mxu0 0.0
    %80 = vmatpush1.msra.mxu0 %v50
    %81 = vmatprep.subr.mxu0 0.0
    %82 = vmatpush1.msra.mxu0 %v49
    %83 = vmatprep.subr.mxu0 0.0
    %84 = vmatpush1.msra.mxu0 %v48
    %85 = vmatprep.subr.mxu0 0.0
    %86 = vmatpush1.msra.mxu0 %v47
    %87 = vmatprep.subr.mxu0 0.0
    %88 = vmatpush1.msra.mxu0 %v46
    %89 = vmatprep.subr.mxu0 0.0
    %90 = vmatpush1.msra.mxu0 %v45
    %91 = vmatprep.subr.mxu0 0.0
    %92 = vmatpush1.msra.mxu0 %v44
    %93 = vmatprep.subr.mxu0 0.0
    %94 = vmatpush1.msra.mxu0 %v43
    %95 = vmatprep.subr.mxu0 0.0
    %96 = vmatpush1.msra.mxu0 %v42
    %97 = vmatprep.subr.mxu0 0.0
    %98 = vmatpush2.msra.mxu0 0.0
    %99 = vmatprep.subr.mxu0 0.0
    %100 = vmatpush2.msra.mxu0 0.0
    %101 = vmatprep.subr.mxu0 0.0
    %102 = vmatpush2.msra.mxu0 0.0
    %103 = vmatprep.subr.mxu0 0.0
    %104 = vmatpush2.msra.mxu0 0.0
    %105 = vmatprep.subr.mxu0 0.0
    %106 = vmatpush2.msra.mxu0 0.0
    %107 = vmatprep.subr.mxu0 0.0
    %108 = vmatpush2.msra.mxu0 0.0
    %109 = vmatprep.subr.mxu0 0.0
    %110 = vmatpush2.msra.mxu0 0.0
    %111 = vmatprep.subr.mxu0 0.0
    %112 = vmatpush2.msra.mxu0 0.0
    %113 = vmatprep.subr.mxu0 0.0
    %114 = vmatpush2.msra.mxu0 0.0
    %115 = vmatprep.subr.mxu0 0.0
    %116 = vmatpush2.msra.mxu0 0.0
    %117 = vmatprep.subr.mxu0 0.0
    %118 = vmatpush2.msra.mxu0 0.0
    %119 = vmatprep.subr.mxu0 0.0
    %120 = vmatpush2.msra.mxu0 0.0
    %121 = vmatprep.subr.mxu0 0.0
    %122 = vmatpush2.msra.mxu0 0.0
    %123 = vmatprep.subr.mxu0 0.0
    %124 = vmatpush2.msra.mxu0 0.0
    %125 = vmatprep.subr.mxu0 0.0
    %126 = vmatpush2.msra.mxu0 0.0
    %127 = vmatprep.subr.mxu0 0.0
    %128 = vmatpush2.msra.mxu0 0.0
    %129 = vmatprep.mubr.f32.mxu0 0.0
    %130 = vmatmul.mubr.f32.gmra.mxu0 %v41
    %v131 = vpop.f32.mrf.mxu0
    %v132 = vadd.f32 %v63, %v131
    %v133 = vpop.f32.mrf.mxu0
    %134 = vdwg.mxu0
    %v135 = vadd.f32 %v132, 0.0
    %vm136 = vcmp.ge.f32.partialorder %v135, 1.0
    %v137 = vsel %vm136, 1.0, 0.0
    %v138 = vadd.f32 %v137, 0.0
    %v139 = vsel %vm136, 0.0, %v135
    %v140 = vmul.f32 %v139, 0.9
    %v141 = vadd.f32 %v140, %v132
    %vm142 = vcmp.ge.f32.partialorder %v141, 1.0
    %v143 = vsel %vm142, 1.0, 0.0
    %v144 = vadd.f32 %v138, %v143
    %v145 = vsel %vm142, 0.0, %v141
    %v146 = vmul.f32 %v145, 0.9
    %v147 = vadd.f32 %v146, %v132
    %vm148 = vcmp.ge.f32.partialorder %v147, 1.0
    %v149 = vsel %vm148, 1.0, 0.0
    %v150 = vadd.f32 %v144, %v149
    %v151 = vsel %vm148, 0.0, %v147
    %v152 = vmul.f32 %v151, 0.9
    %v153 = vadd.f32 %v152, %v132
    %vm154 = vcmp.ge.f32.partialorder %v153, 1.0
    %v155 = vsel %vm154, 1.0, 0.0
    %v156 = vadd.f32 %v150, %v155
    %v157 = vsel %vm154, 0.0, %v153
    %v158 = vmul.f32 %v157, 0.9
    %v159 = vadd.f32 %v158, %v132
    %vm160 = vcmp.ge.f32.partialorder %v159, 1.0
    %v161 = vsel %vm160, 1.0, 0.0
    %v162 = vadd.f32 %v156, %v161
    %v163 = vsel %vm160, 0.0, %v159
    %v164 = vmul.f32 %v163, 0.9
    %v165 = vadd.f32 %v164, %v132
    %vm166 = vcmp.ge.f32.partialorder %v165, 1.0
    %v167 = vsel %vm166, 1.0, 0.0
    %v168 = vadd.f32 %v162, %v167
    %v169 = vsel %vm166, 0.0, %v165
    %v170 = vmul.f32 %v169, 0.9
    %v171 = vadd.f32 %v170, %v132
    %vm172 = vcmp.ge.f32.partialorder %v171, 1.0
    %v173 = vsel %vm172, 1.0, 0.0
    %v174 = vadd.f32 %v168, %v173
    %v175 = vsel %vm172, 0.0, %v171
    %v176 = vmul.f32 %v175, 0.9
    %v177 = vadd.f32 %v176, %v132
    %vm178 = vcmp.ge.f32.partialorder %v177, 1.0
    %v179 = vsel %vm178, 1.0, 0.0
    %v180 = vadd.f32 %v174, %v179
    %v181 = vsel %vm178, 0.0, %v177
    %v182 = vmul.f32 %v181, 0.9
    %v183 = vadd.f32 %v182, %v132
    %vm184 = vcmp.ge.f32.partialorder %v183, 1.0
    %v185 = vsel %vm184, 1.0, 0.0
    %v186 = vadd.f32 %v180, %v185
    %v187 = vsel %vm184, 0.0, %v183
    %v188 = vmul.f32 %v187, 0.9
    %v189 = vadd.f32 %v188, %v132
    %vm190 = vcmp.ge.f32.partialorder %v189, 1.0
    %v191 = vsel %vm190, 1.0, 0.0
    %v192 = vadd.f32 %v186, %v191
    %v193 = vmul.f32 %v192, 0.1
    %194 = vst [vmem:[#allocation7] sm:$0xff] %v193
    // Predicated region
    $region22: #{tpu_custom_call.1} parent=1 // pred_check
      _
    $region23: #{tpu_custom_call.1} parent=1 // pred_check_branch
      %196 = sbr.rel (0) target = $region25
    $region24: #{tpu_custom_call.1} parent=1 // pred_region
      %s198 = ssub.s32 128, 128
      %199 = vsyncadd [#allocation4], %s198
      %s201 = sshll.u32 [#allocation7], 4
      %s202 = int_to_ptr.vmem [resolvable:$true] %s201
      %204 = dma.vmem_to_hbm [thread:$0]  %s202, 128, %s3, [#allocation4]
    $region25: #{tpu_custom_call.1} parent=1 // pred_fallthru
      _
    // Predicated region
    $region26: #{tpu_custom_call.1} parent=1 // pred_check
      _
    $region27: #{tpu_custom_call.1} parent=1 // pred_check_branch
      %206 = sbr.rel (0) target = $region29
    $region28: #{tpu_custom_call.1} parent=1 // pred_region
      %207 = dma.done [#allocation4], 128
    $region29: #{tpu_custom_call.1} parent=1 // pred_fallthru
      _
    %208 = vsyncpa [#allocation3], 1
    %209 = vsyncpa [#allocation6], 1
    %210 = vsyncpa [#allocation4], 1

</llo_original>
